<compile_context>
chip_gen: v5e
topology: v5e:2x2
jax: 0.10.0
libtpu: 0.0.40
codegen_flags: <defaults>
</compile_context>

<pallas_src>
import functools

import jax
import jax.numpy as jnp
from jax import lax
from jax.experimental import pallas as pl
from jax.experimental.pallas import tpu as pltpu


def _spatial_attention_kernel(x_ref, m1_ref, m2_ref, bs_ref, vs_ref, o_ref, *, Bb, N, T):
    # x_ref : (Bb*N, F*T)  rows ordered b*N + n
    # m1_ref: (F*T, T)     folded W1/W2 contraction
    # m2_ref: (F*T, T)     folded W3 contraction
    # bs_ref: (N, N), vs_ref: (N, N)
    # o_ref : (Bb, N, N)
    x = x_ref[...]

    # Two MXU matmuls over all Bb*N rows at once (no per-batch loop, no fused
    # weight -> no lane-offset slice of the result).
    lhs = jnp.dot(x, m1_ref[...], preferred_element_type=jnp.float32)   # (Bb*N, T)
    xw3 = jnp.dot(x, m2_ref[...], preferred_element_type=jnp.float32)   # (Bb*N, T)

    # Row-major split of the leading dim; N % 8 == 0 keeps the (8,128) tiling
    # intact, so these reshapes are layout-preserving.
    lhs = lhs.reshape(Bb, N, T)
    xw3 = xw3.reshape(Bb, N, T)

    # product[b, n1, n2] = sum_t lhs[b, n1, t] * xw3[b, n2, t]
    # -- batched dot_general, contracting T, no transpose materialized.
    prod = lax.dot_general(
        lhs, xw3,
        dimension_numbers=(((2,), (2,)), ((0,), (0,))),
        preferred_element_type=jnp.float32)                              # (Bb, N, N)

    sig = jax.nn.sigmoid(prod + bs_ref[...][None, :, :])                 # (Bb, N, N)

    # S[b, n, k] = sum_m Vs[n, m] * sig[b, m, k] as one batched matmul
    # (Vs broadcast over the batch dim; 1 KiB, hoisted once).
    vs_b = jnp.broadcast_to(vs_ref[...], (Bb, N, N))
    S = lax.dot_general(
        vs_b, sig,
        dimension_numbers=(((2,), (1,)), ((0,), (0,))),
        preferred_element_type=jnp.float32)                              # (Bb, N, N)

    # F.softmax(S, dim=1) on (B, N, N)  ==  softmax over axis 1 of each slab.
    # Exact normalization (no approx reciprocal) for bit-closeness to the ref.
    m = jnp.max(S, axis=1, keepdims=True)
    e = jnp.exp(S - m)
    denom = jnp.sum(e, axis=1, keepdims=True)
    o_ref[...] = (e / denom).astype(o_ref.dtype)                         # single store


def _pick_batch_block(B, N, FT, *, dtype_bytes=4,
                      vmem_budget_bytes=8 << 20, min_grid_steps=1):
    """Largest divisor Bb of B whose double-buffered per-step footprint fits the
    VMEM budget while leaving at least `min_grid_steps` grid steps.

    Per-step footprint ~ 2*(x block) + 2*(out block) (BlockSpec double-buffers
    each operand); the few-KiB weights are ignored.  On v7x (64 MiB VMEM,
    2 TensorCores) pass a smaller budget and min_grid_steps=2 when the
    per-batch work is large enough to be worth sharding across cores.
    """
    per_batch = 2 * N * (FT + N) * dtype_bytes
    cap = max(1, vmem_budget_bytes // max(per_batch, 1))
    best = 1
    for bb in range(1, B + 1):
        if B % bb == 0 and bb <= cap and (B // bb) >= min_grid_steps:
            best = bb
    return best


def spatial_attention(x, x_time_id, y_time_id, W1, W2, W3, bs, Vs, *, batch_block=None):
    """x: (B, N, F_in, T) float32. Returns (B, N, N)."""
    del x_time_id, y_time_id  # unused by the PyTorch forward as well
    B, N, F_in, T = x.shape
    FT = F_in * T
    dtype = x.dtype

    # Glue reshape (wrapper side, free): (B, N, F_in, T) -> (B*N, F_in*T),
    # row index = b*N + n, column index = f*T + t.
    x2 = x.reshape(B * N, FT)

    # Pure weight algebra (no data dependence):
    #   lhs = einsum('nft,t,fk->nk', x, W1, W2)  ==  x2 @ M1
    #   xw3 = einsum('nft,f->nt',    x, W3)      ==  x2 @ M2
    M1 = (W1[None, :, None] * W2[:, None, :]).reshape(FT, T).astype(dtype)
    M2 = (W3[:, None, None] * jnp.eye(T, dtype=W3.dtype)[None, :, :]).reshape(FT, T).astype(dtype)
    bs2 = bs.reshape(N, N).astype(dtype)
    Vs = Vs.astype(dtype)

    Bb = _pick_batch_block(B, N, FT) if batch_block is None else batch_block
    assert B % Bb == 0, (B, Bb)
    grid = (B // Bb,)

    kernel = functools.partial(_spatial_attention_kernel, Bb=Bb, N=N, T=T)

    return pl.pallas_call(
        kernel,
        out_shape=jax.ShapeDtypeStruct((B, N, N), dtype),
        grid_spec=pltpu.PrefetchScalarGridSpec(
            num_scalar_prefetch=0,
            grid=grid,
            in_specs=[
                pl.BlockSpec((Bb * N, FT), lambda i: (i, 0)),   # x rows for Bb batches
                pl.BlockSpec((FT, T), lambda i: (0, 0)),        # M1 (W1/W2 folded)
                pl.BlockSpec((FT, T), lambda i: (0, 0)),        # M2 (W3 folded)
                pl.BlockSpec((N, N), lambda i: (0, 0)),         # bs
                pl.BlockSpec((N, N), lambda i: (0, 0)),         # Vs
            ],
            out_specs=pl.BlockSpec((Bb, N, N), lambda i: (i, 0, 0)),
        ),
        compiler_params=pltpu.CompilerParams(
            dimension_semantics=("parallel",)),
    )(x2, M1, M2, bs2, Vs)


def reference(x, W1, W2, W3, bs, Vs):
    """Pure-JAX mirror of the PyTorch forward, for correctness checking."""
    lhs = jnp.einsum('bnft,t->bnf', x, W1)
    lhs = jnp.einsum('bnf,ft->bnt', lhs, W2)                 # (B, N, T)
    xw3 = jnp.einsum('f,bnft->bnt', W3, x)                   # (B, N, T); rhs = xw3^T
    product = jnp.einsum('bnt,bmt->bnm', lhs, xw3)           # (B, N, N)
    S = jnp.einsum('nm,bmk->bnk', Vs, jax.nn.sigmoid(product + bs))
    return jax.nn.softmax(S, axis=1)


if __name__ == "__main__":
    key = jax.random.PRNGKey(0)
    B, N, F_in, T = 2, 16, 4, 8
    ks = jax.random.split(key, 8)

    x = jax.random.normal(ks[0], (B, N, F_in, T), jnp.float32)
    x_time_id = jax.random.normal(ks[1], (B, T, 2), jnp.float32)  # unused by forward
    y_time_id = jax.random.normal(ks[2], (B, T, 2), jnp.float32)  # unused by forward

    # Deterministic synthetic parameters (module __init__ leaves them uninitialized).
    W1 = jax.random.normal(ks[3], (T,), jnp.float32) * 0.1
    W2 = jax.random.normal(ks[4], (F_in, T), jnp.float32) * 0.1
    W3 = jax.random.normal(ks[5], (F_in,), jnp.float32) * 0.1
    bs = jax.random.normal(ks[6], (1, N, N), jnp.float32) * 0.1
    Vs = jax.random.normal(ks[7], (N, N), jnp.float32) * 0.1

    out = spatial_attention(x, x_time_id, y_time_id, W1, W2, W3, bs, Vs)
    out = jax.block_until_ready(out)

    ref = reference(x, W1, W2, W3, bs, Vs)
    assert out.shape == (B, N, N), out.shape
    max_err = float(jnp.abs(out - ref).max())
    assert jnp.allclose(out, ref, atol=2e-5, rtol=2e-5), max_err
    print("KERNEL_OK")
</pallas_src>

<mosaic_0001>
module attributes {stable_mosaic.version = 11 : i64} {
  func.func @_spatial_attention_kernel(%arg0: i32, %arg1: memref<32x32xf32, #tpu.memory_space<vmem>>, %arg2: memref<32x8xf32, #tpu.memory_space<vmem>>, %arg3: memref<32x8xf32, #tpu.memory_space<vmem>>, %arg4: memref<16x16xf32, #tpu.memory_space<vmem>>, %arg5: memref<16x16xf32, #tpu.memory_space<vmem>>, %arg6: memref<2x16x16xf32, #tpu.memory_space<vmem>>) attributes {dimension_semantics = [#tpu.dimension_semantics<parallel>], iteration_bounds = array<i64: 1>, scalar_prefetch = 0 : i64, scratch_operands = 0 : i64, tpu.core_type = #tpu.core_type<tc>, window_params = [{transform_indices = @transform_0, window_bounds = array<i64: 32, 32>}, {pipeline_mode = #tpu.pipeline_mode<synchronous>, transform_indices = @transform_1, window_bounds = array<i64: 32, 8>}, {pipeline_mode = #tpu.pipeline_mode<synchronous>, transform_indices = @transform_2, window_bounds = array<i64: 32, 8>}, {pipeline_mode = #tpu.pipeline_mode<synchronous>, transform_indices = @transform_3, window_bounds = array<i64: 16, 16>}, {pipeline_mode = #tpu.pipeline_mode<synchronous>, transform_indices = @transform_4, window_bounds = array<i64: 16, 16>}, {transform_indices = @transform_5, window_bounds = array<i64: 2, 16, 16>}]} {
    %c0 = arith.constant 0 : index
    %c0_0 = arith.constant 0 : index
    %0 = vector.load %arg1[%c0, %c0_0] : memref<32x32xf32, #tpu.memory_space<vmem>>, vector<32x32xf32>
    %c0_1 = arith.constant 0 : index
    %c0_2 = arith.constant 0 : index
    %1 = vector.load %arg2[%c0_1, %c0_2] : memref<32x8xf32, #tpu.memory_space<vmem>>, vector<32x8xf32>
    %cst = arith.constant dense<0.000000e+00> : vector<32x8xf32>
    %2 = tpu.matmul %0, %1, %cst {dimension_numbers = #tpu.dot_dimension_numbers<[1], [0], [0], [1], [0, 0, 1, 1], [], []>} : vector<32x32xf32>, vector<32x8xf32>, vector<32x8xf32> -> vector<32x8xf32>
    %c0_3 = arith.constant 0 : index
    %c0_4 = arith.constant 0 : index
    %3 = vector.load %arg3[%c0_3, %c0_4] : memref<32x8xf32, #tpu.memory_space<vmem>>, vector<32x8xf32>
    %cst_5 = arith.constant dense<0.000000e+00> : vector<32x8xf32>
    %4 = tpu.matmul %0, %3, %cst_5 {dimension_numbers = #tpu.dot_dimension_numbers<[1], [0], [0], [1], [0, 0, 1, 1], [], []>} : vector<32x32xf32>, vector<32x8xf32>, vector<32x8xf32> -> vector<32x8xf32>
    %5 = vector.shape_cast %2 : vector<32x8xf32> to vector<2x16x8xf32>
    %6 = vector.shape_cast %4 : vector<32x8xf32> to vector<2x16x8xf32>
    %cst_6 = arith.constant dense<0.000000e+00> : vector<2x16x16xf32>
    %7 = tpu.matmul %5, %6, %cst_6 {dimension_numbers = #tpu.dot_dimension_numbers<[2], [2], [1], [1], [0, 0, 0, 1, 1, 1], [0], [0]>} : vector<2x16x8xf32>, vector<2x16x8xf32>, vector<2x16x16xf32> -> vector<2x16x16xf32>
    %c0_7 = arith.constant 0 : index
    %c0_8 = arith.constant 0 : index
    %8 = vector.load %arg4[%c0_7, %c0_8] : memref<16x16xf32, #tpu.memory_space<vmem>>, vector<16x16xf32>
    %9 = vector.shape_cast %8 : vector<16x16xf32> to vector<1x16x16xf32>
    %10 = vector.broadcast %9 : vector<1x16x16xf32> to vector<2x16x16xf32>
    %11 = arith.addf %7, %10 : vector<2x16x16xf32>
    %12 = arith.negf %11 : vector<2x16x16xf32>
    %13 = math.exp %12 : vector<2x16x16xf32>
    %cst_9 = arith.constant 1.000000e+00 : f32
    %14 = vector.broadcast %cst_9 : f32 to vector<2x16x16xf32>
    %15 = arith.addf %14, %13 : vector<2x16x16xf32>
    %16 = arith.divf %14, %15 : vector<2x16x16xf32>
    %c0_10 = arith.constant 0 : index
    %c0_11 = arith.constant 0 : index
    %17 = vector.load %arg5[%c0_10, %c0_11] : memref<16x16xf32, #tpu.memory_space<vmem>>, vector<16x16xf32>
    %18 = vector.shape_cast %17 : vector<16x16xf32> to vector<1x16x16xf32>
    %19 = vector.broadcast %18 : vector<1x16x16xf32> to vector<2x16x16xf32>
    %cst_12 = arith.constant dense<0.000000e+00> : vector<2x16x16xf32>
    %20 = tpu.matmul %19, %16, %cst_12 {dimension_numbers = #tpu.dot_dimension_numbers<[2], [1], [1], [2], [0, 0, 0, 1, 1, 2], [0], [0]>} : vector<2x16x16xf32>, vector<2x16x16xf32>, vector<2x16x16xf32> -> vector<2x16x16xf32>
    %cst_13 = arith.constant dense<0xFF800000> : vector<2x16xf32>
    %21 = vector.multi_reduction <maximumf>, %20, %cst_13 [1] : vector<2x16x16xf32> to vector<2x16xf32>
    %22 = vector.shape_cast %21 : vector<2x16xf32> to vector<2x1x16xf32>
    %23 = vector.broadcast %22 : vector<2x1x16xf32> to vector<2x16x16xf32>
    %24 = arith.subf %20, %23 : vector<2x16x16xf32>
    %25 = math.exp %24 : vector<2x16x16xf32>
    %cst_14 = arith.constant dense<0.000000e+00> : vector<2x16xf32>
    %26 = vector.multi_reduction <add>, %25, %cst_14 [1] : vector<2x16x16xf32> to vector<2x16xf32>
    %27 = vector.shape_cast %26 : vector<2x16xf32> to vector<2x1x16xf32>
    %28 = vector.broadcast %27 : vector<2x1x16xf32> to vector<2x16x16xf32>
    %29 = arith.divf %25, %28 : vector<2x16x16xf32>
    %c0_15 = arith.constant 0 : index
    %c0_16 = arith.constant 0 : index
    %c0_17 = arith.constant 0 : index
    %30 = vector.load %arg6[%c0_15, %c0_16, %c0_17] : memref<2x16x16xf32, #tpu.memory_space<vmem>>, vector<2x16x16xf32>
    tpu.vector_store %arg6[%c0_15, %c0_16, %c0_17], %29 {strides = array<i32>} : memref<2x16x16xf32, #tpu.memory_space<vmem>>, vector<2x16x16xf32>,
    return
  }
  func.func @transform_0(%arg0: i32) -> (i32, i32) {
    %c0_i32 = arith.constant 0 : i32
    %c0_i32_0 = arith.constant 0 : i32
    return %arg0, %c0_i32 : i32, i32
  }
  func.func @transform_1(%arg0: i32) -> (i32, i32) {
    %c0_i32 = arith.constant 0 : i32
    %c0_i32_0 = arith.constant 0 : i32
    %c0_i32_1 = arith.constant 0 : i32
    return %c0_i32, %c0_i32_0 : i32, i32
  }
  func.func @transform_2(%arg0: i32) -> (i32, i32) {
    %c0_i32 = arith.constant 0 : i32
    %c0_i32_0 = arith.constant 0 : i32
    %c0_i32_1 = arith.constant 0 : i32
    return %c0_i32, %c0_i32_0 : i32, i32
  }
  func.func @transform_3(%arg0: i32) -> (i32, i32) {
    %c0_i32 = arith.constant 0 : i32
    %c0_i32_0 = arith.constant 0 : i32
    %c0_i32_1 = arith.constant 0 : i32
    return %c0_i32, %c0_i32_0 : i32, i32
  }
  func.func @transform_4(%arg0: i32) -> (i32, i32) {
    %c0_i32 = arith.constant 0 : i32
    %c0_i32_0 = arith.constant 0 : i32
    %c0_i32_1 = arith.constant 0 : i32
    return %c0_i32, %c0_i32_0 : i32, i32
  }
  func.func @transform_5(%arg0: i32) -> (i32, i32, i32) {
    %c0_i32 = arith.constant 0 : i32
    %c0_i32_0 = arith.constant 0 : i32
    %c0_i32_1 = arith.constant 0 : i32
    return %arg0, %c0_i32, %c0_i32_0 : i32, i32, i32
  }
}

</mosaic_0001>

<llo_original>
// kernel: tpu_custom_call.1
$region0: #{tpu_custom_call.1}
  #allocation0 [shape = 'u32[]', space=smem, size = 0x4, offset = 0x4, fixed_abs, tag = 'smem constant byte address 0x4 - core index']
  #allocation1 [shape = 'u32[72,128]{1,0:T(1,128)}', space=vmem, size = 0x9000, scoped, tag = 'internal scratch']
  %s0 = inlined_call_operand.vmem [shape: f32[32,32], index: 0, kind: input, shape index: {}]
  %s1 = inlined_call_operand.vmem [shape: f32[32,8], index: 1, kind: input, shape index: {}]
  %s2 = inlined_call_operand.vmem [shape: f32[32,8], index: 2, kind: input, shape index: {}]
  %s3 = inlined_call_operand.vmem [shape: f32[16,16], index: 3, kind: input, shape index: {}]
  %s4 = inlined_call_operand.vmem [shape: f32[16,16], index: 4, kind: input, shape index: {}]
  %s5 = inlined_call_operand.hbm [shape: f32[2,16,16], index: 5, kind: output, shape index: {}]
  %s6 = sld [smem:[#allocation0]]
  $region30: #{tpu_custom_call.1} parent=0
    _
  %s8 = ssub.s32 1, %s6
  %s9 = scalar_select 0, %s8, %s6
  $region1: #{tpu_custom_call.1} parent=0
    #allocation2 [shape = 'u8[16384]{0}', space=vmem, size = 0x4000, scoped, tag = 'output window, operand 0, single buffered']
    #allocation3 [shape = 's32[1]{0}', space=sflag, size = 0x4, scoped, tag = 'scoped memory for tpu_custom_call.1']
    %10 = vsyncpa [#allocation3], 0
    // Predicated region
    $region2: #{tpu_custom_call.1} parent=1 // pred_check
      _
    $region3: #{tpu_custom_call.1} parent=1 // pred_check_branch
      %12 = sbr.rel (0) target = $region5
    $region4: #{tpu_custom_call.1} parent=1 // pred_region
      _
    $region5: #{tpu_custom_call.1} parent=1 // pred_fallthru
      _
    // Predicated region
    $region6: #{tpu_custom_call.1} parent=1 // pred_check
      _
    $region7: #{tpu_custom_call.1} parent=1 // pred_check_branch
      %14 = sbr.rel (0) target = $region9
    $region8: #{tpu_custom_call.1} parent=1 // pred_region
      _
    $region9: #{tpu_custom_call.1} parent=1 // pred_fallthru
      _
    // Predicated region
    $region10: #{tpu_custom_call.1} parent=1 // pred_check
      _
    $region11: #{tpu_custom_call.1} parent=1 // pred_check_branch
      %16 = sbr.rel (0) target = $region13
    $region12: #{tpu_custom_call.1} parent=1 // pred_region
      _
    $region13: #{tpu_custom_call.1} parent=1 // pred_fallthru
      _
    // Predicated region
    $region14: #{tpu_custom_call.1} parent=1 // pred_check
      _
    $region15: #{tpu_custom_call.1} parent=1 // pred_check_branch
      %18 = sbr.rel (0) target = $region17
    $region16: #{tpu_custom_call.1} parent=1 // pred_region
      _
    $region17: #{tpu_custom_call.1} parent=1 // pred_fallthru
      _
    // Predicated region
    $region18: #{tpu_custom_call.1} parent=1 // pred_check
      _
    $region19: #{tpu_custom_call.1} parent=1 // pred_check_branch
      %20 = sbr.rel (0) target = $region21
    $region20: #{tpu_custom_call.1} parent=1 // pred_region
      _
    $region21: #{tpu_custom_call.1} parent=1 // pred_fallthru
      _
    %v21 = vld [vmem:[%s0] sm:$0xff]
    %v22 = vld [vmem:[%s0 + $0x8] sm:$0xff]
    %v23 = vld [vmem:[%s0 + $0x10] sm:$0xff]
    %v24 = vld [vmem:[%s0 + $0x18] sm:$0xff]
    %v25 = vld [vmem:[%s1] sm:$0xff]
    %v26 = vld [vmem:[%s1 + $0x8] sm:$0xff]
    %v27 = vld [vmem:[%s1 + $0x10] sm:$0xff]
    %v28 = vld [vmem:[%s1 + $0x18] sm:$0xff]
    %vm29 = vcmask 261120
    %v31 = vsel %vm29, %v21, 0
    %v34 = vsel %vm29, %v22, 0
    %v37 = vsel %vm29, %v23, 0
    %v40 = vsel %vm29, %v24, 0
    %42 = vmatpush.msra.mxu0 0.0
    %43 = vmatpush.msra.mxu0 0.0
    %44 = vmatpush.msra.mxu0 0.0
    %45 = vmatpush.msra.mxu0 0.0
    %46 = vmatpush.msra.mxu0 0.0
    %47 = vmatpush.msra.mxu0 0.0
    %48 = vmatpush.msra.mxu0 0.0
    %49 = vmatpush.msra.mxu0 0.0
    %50 = vmatpush.msra.mxu0 0.0
    %51 = vmatpush.msra.mxu0 0.0
    %52 = vmatpush.msra.mxu0 0.0
    %53 = vmatpush.msra.mxu0 0.0
    %54 = vmatpush.msra.mxu0 %v28
    %55 = vmatpush.msra.mxu0 %v27
    %56 = vmatpush.msra.mxu0 %v26
    %57 = vmatpush.msra.mxu0 %v25
    %58 = vmatmul.f32.gmra.mxu0 %v31
    %v59 = vpop.f32.mrf.mxu0
    %v60 = vadd.f32 0.0, %v59
    %61 = vmatmul.f32.gmra.mxu0 %v34
    %v62 = vpop.f32.mrf.mxu0
    %v63 = vadd.f32 0.0, %v62
    %64 = vmatmul.f32.gmra.mxu0 %v37
    %v65 = vpop.f32.mrf.mxu0
    %v66 = vadd.f32 0.0, %v65
    %67 = vmatmul.f32.gmra.mxu0 %v40
    %v68 = vpop.f32.mrf.mxu0
    %v69 = vadd.f32 0.0, %v68
    %70 = vdwg.mxu0
    %v71 = vld [vmem:[%s2] sm:$0xff]
    %v72 = vld [vmem:[%s2 + $0x8] sm:$0xff]
    %v73 = vld [vmem:[%s2 + $0x10] sm:$0xff]
    %v74 = vld [vmem:[%s2 + $0x18] sm:$0xff]
    %75 = vmatpush.msra.mxu0 0.0
    %76 = vmatpush.msra.mxu0 0.0
    %77 = vmatpush.msra.mxu0 0.0
    %78 = vmatpush.msra.mxu0 0.0
    %79 = vmatpush.msra.mxu0 0.0
    %80 = vmatpush.msra.mxu0 0.0
    %81 = vmatpush.msra.mxu0 0.0
    %82 = vmatpush.msra.mxu0 0.0
    %83 = vmatpush.msra.mxu0 0.0
    %84 = vmatpush.msra.mxu0 0.0
    %85 = vmatpush.msra.mxu0 0.0
    %86 = vmatpush.msra.mxu0 0.0
    %87 = vmatpush.msra.mxu0 %v74
    %88 = vmatpush.msra.mxu0 %v73
    %89 = vmatpush.msra.mxu0 %v72
    %90 = vmatpush.msra.mxu0 %v71
    %91 = vmatmul.f32.gmra.mxu0 %v31
    %v92 = vpop.f32.mrf.mxu0
    %v93 = vadd.f32 0.0, %v92
    %94 = vmatmul.f32.gmra.mxu0 %v34
    %v95 = vpop.f32.mrf.mxu0
    %v96 = vadd.f32 0.0, %v95
    %97 = vmatmul.f32.gmra.mxu0 %v37
    %v98 = vpop.f32.mrf.mxu0
    %v99 = vadd.f32 0.0, %v98
    %100 = vmatmul.f32.gmra.mxu0 %v40
    %v101 = vpop.f32.mrf.mxu0
    %v102 = vadd.f32 0.0, %v101
    %103 = vdwg.mxu0
    %v104 = vld [vmem:[%s3] sm:$0xff]
    %v105 = vld [vmem:[%s3 + $0x8] sm:$0xff]
    %vm106 = vcmask 64512
    %v108 = vsel %vm106, %v60, 0
    %v111 = vsel %vm106, %v63, 0
    %v114 = vsel %vm106, %v93, 0
    %v117 = vsel %vm106, %v96, 0
    %119 = vmatpush.xpose.msra.mxu0 0.0
    %120 = vmatpush.xpose.msra.mxu0 0.0
    %121 = vmatpush.xpose.msra.mxu0 0.0
    %122 = vmatpush.xpose.msra.mxu0 0.0
    %123 = vmatpush.xpose.msra.mxu0 0.0
    %124 = vmatpush.xpose.msra.mxu0 0.0
    %125 = vmatpush.xpose.msra.mxu0 0.0
    %126 = vmatpush.xpose.msra.mxu0 0.0
    %127 = vmatpush.xpose.msra.mxu0 0.0
    %128 = vmatpush.xpose.msra.mxu0 0.0
    %129 = vmatpush.xpose.msra.mxu0 0.0
    %130 = vmatpush.xpose.msra.mxu0 0.0
    %131 = vmatpush.xpose.msra.mxu0 0.0
    %132 = vmatpush.xpose.msra.mxu0 0.0
    %133 = vmatpush.xpose.msra.mxu0 %v117
    %134 = vmatpush.xpose.msra.mxu0 %v114
    %135 = vmatmul.f32.gmra.mxu0 %v108
    %v136 = vpop.f32.mrf.mxu0
    %v137 = vadd.f32 %v104, %v136
    %138 = vmatmul.f32.gmra.mxu0 %v111
    %v139 = vpop.f32.mrf.mxu0
    %v140 = vadd.f32 %v105, %v139
    %141 = vdwg.mxu0
    %v143 = vsel %vm106, %v66, 0
    %v146 = vsel %vm106, %v69, 0
    %v149 = vsel %vm106, %v99, 0
    %v152 = vsel %vm106, %v102, 0
    %154 = vmatpush.xpose.msra.mxu0 0.0
    %155 = vmatpush.xpose.msra.mxu0 0.0
    %156 = vmatpush.xpose.msra.mxu0 0.0
    %157 = vmatpush.xpose.msra.mxu0 0.0
    %158 = vmatpush.xpose.msra.mxu0 0.0
    %159 = vmatpush.xpose.msra.mxu0 0.0
    %160 = vmatpush.xpose.msra.mxu0 0.0
    %161 = vmatpush.xpose.msra.mxu0 0.0
    %162 = vmatpush.xpose.msra.mxu0 0.0
    %163 = vmatpush.xpose.msra.mxu0 0.0
    %164 = vmatpush.xpose.msra.mxu0 0.0
    %165 = vmatpush.xpose.msra.mxu0 0.0
    %166 = vmatpush.xpose.msra.mxu0 0.0
    %167 = vmatpush.xpose.msra.mxu0 0.0
    %168 = vmatpush.xpose.msra.mxu0 %v152
    %169 = vmatpush.xpose.msra.mxu0 %v149
    %170 = vmatmul.f32.gmra.mxu0 %v143
    %v171 = vpop.f32.mrf.mxu0
    %v172 = vadd.f32 %v104, %v171
    %173 = vmatmul.f32.gmra.mxu0 %v146
    %v174 = vpop.f32.mrf.mxu0
    %v175 = vadd.f32 %v105, %v174
    %176 = vdwg.mxu0
    %v177 = vxor.u32 %v137, 2147483648
    %v178 = vxor.u32 %v140, 2147483648
    %v179 = vxor.u32 %v172, 2147483648
    %v180 = vxor.u32 %v175, 2147483648
    %v181 = vmul.f32 %v177, 1.442695
    %v182 = vpow.pop %v181
    %v183 = vmul.f32 %v178, 1.442695
    %v184 = vpow.pop %v183
    %v185 = vmul.f32 %v179, 1.442695
    %v186 = vpow.pop %v185
    %v187 = vmul.f32 %v180, 1.442695
    %v188 = vpow.pop %v187
    %v189 = vadd.f32 %v182, 1.0
    %v190 = vadd.f32 %v184, 1.0
    %v191 = vadd.f32 %v186, 1.0
    %v192 = vadd.f32 %v188, 1.0
    %v193 = vrcp.pop %v189
    %v194 = vmul.f32 %v189, %v193
    %v195 = vsub.f32 1.0, %v194
    %v196 = vmul.f32 %v193, %v195
    %v197 = vadd.f32 %v193, %v196
    %vm198 = vweird.f32 %v189
    %vm199 = vweird.f32 %v193
    %vm200 = vmor %vm198, %vm199
    %v201 = vsel %vm200, %v193, %v197
    %v202 = vand.u32 2147483647, %v189
    %vm203 = vcmp.eq.f32.partialorder %v202, 8.507059e+37
    %v204 = vand.u32 %v189, 2147483648
    %v205 = vor.u32 1.1754944e-38, %v204
    %v206 = vsel %vm203, %v205, %v201
    %v207 = vmul.f32 1.0, %v206
    %v208 = vrcp.pop %v190
    %v209 = vmul.f32 %v190, %v208
    %v210 = vsub.f32 1.0, %v209
    %v211 = vmul.f32 %v208, %v210
    %v212 = vadd.f32 %v208, %v211
    %vm213 = vweird.f32 %v190
    %vm214 = vweird.f32 %v208
    %vm215 = vmor %vm213, %vm214
    %v216 = vsel %vm215, %v208, %v212
    %v217 = vand.u32 2147483647, %v190
    %vm218 = vcmp.eq.f32.partialorder %v217, 8.507059e+37
    %v219 = vand.u32 %v190, 2147483648
    %v220 = vor.u32 1.1754944e-38, %v219
    %v221 = vsel %vm218, %v220, %v216
    %v222 = vmul.f32 1.0, %v221
    %v223 = vrcp.pop %v191
    %v224 = vmul.f32 %v191, %v223
    %v225 = vsub.f32 1.0, %v224
    %v226 = vmul.f32 %v223, %v225
    %v227 = vadd.f32 %v223, %v226
    %vm228 = vweird.f32 %v191
    %vm229 = vweird.f32 %v223
    %vm230 = vmor %vm228, %vm229
    %v231 = vsel %vm230, %v223, %v227
    %v232 = vand.u32 2147483647, %v191
    %vm233 = vcmp.eq.f32.partialorder %v232, 8.507059e+37
    %v234 = vand.u32 %v191, 2147483648
    %v235 = vor.u32 1.1754944e-38, %v234
    %v236 = vsel %vm233, %v235, %v231
    %v237 = vmul.f32 1.0, %v236
    %v238 = vrcp.pop %v192
    %v239 = vmul.f32 %v192, %v238
    %v240 = vsub.f32 1.0, %v239
    %v241 = vmul.f32 %v238, %v240
    %v242 = vadd.f32 %v238, %v241
    %vm243 = vweird.f32 %v192
    %vm244 = vweird.f32 %v238
    %vm245 = vmor %vm243, %vm244
    %v246 = vsel %vm245, %v238, %v242
    %v247 = vand.u32 2147483647, %v192
    %vm248 = vcmp.eq.f32.partialorder %v247, 8.507059e+37
    %v249 = vand.u32 %v192, 2147483648
    %v250 = vor.u32 1.1754944e-38, %v249
    %v251 = vsel %vm248, %v250, %v246
    %v252 = vmul.f32 1.0, %v251
    %v253 = vld [vmem:[%s4] sm:$0xff]
    %v254 = vld [vmem:[%s4 + $0x8] sm:$0xff]
    %vm255 = vcmask 130048
    %v257 = vsel %vm255, %v253, 0
    %v260 = vsel %vm255, %v254, 0
    %262 = vmatpush.msra.mxu0 0.0
    %263 = vmatpush.msra.mxu0 0.0
    %264 = vmatpush.msra.mxu0 0.0
    %265 = vmatpush.msra.mxu0 0.0
    %266 = vmatpush.msra.mxu0 0.0
    %267 = vmatpush.msra.mxu0 0.0
    %268 = vmatpush.msra.mxu0 0.0
    %269 = vmatpush.msra.mxu0 0.0
    %270 = vmatpush.msra.mxu0 0.0
    %271 = vmatpush.msra.mxu0 0.0
    %272 = vmatpush.msra.mxu0 0.0
    %273 = vmatpush.msra.mxu0 0.0
    %274 = vmatpush.msra.mxu0 0.0
    %275 = vmatpush.msra.mxu0 0.0
    %276 = vmatpush.msra.mxu0 %v222
    %277 = vmatpush.msra.mxu0 %v207
    %278 = vmatmul.f32.gmra.mxu0 %v257
    %v279 = vpop.f32.mrf.mxu0
    %v280 = vadd.f32 0.0, %v279
    %281 = vmatmul.f32.gmra.mxu0 %v260
    %v282 = vpop.f32.mrf.mxu0
    %v283 = vadd.f32 0.0, %v282
    %284 = vdwg.mxu0
    %285 = vmatpush.msra.mxu0 0.0
    %286 = vmatpush.msra.mxu0 0.0
    %287 = vmatpush.msra.mxu0 0.0
    %288 = vmatpush.msra.mxu0 0.0
    %289 = vmatpush.msra.mxu0 0.0
    %290 = vmatpush.msra.mxu0 0.0
    %291 = vmatpush.msra.mxu0 0.0
    %292 = vmatpush.msra.mxu0 0.0
    %293 = vmatpush.msra.mxu0 0.0
    %294 = vmatpush.msra.mxu0 0.0
    %295 = vmatpush.msra.mxu0 0.0
    %296 = vmatpush.msra.mxu0 0.0
    %297 = vmatpush.msra.mxu0 0.0
    %298 = vmatpush.msra.mxu0 0.0
    %299 = vmatpush.msra.mxu0 %v252
    %300 = vmatpush.msra.mxu0 %v237
    %301 = vmatmul.f32.gmra.mxu0 %v257
    %v302 = vpop.f32.mrf.mxu0
    %v303 = vadd.f32 0.0, %v302
    %304 = vmatmul.f32.gmra.mxu0 %v260
    %v305 = vpop.f32.mrf.mxu0
    %v306 = vadd.f32 0.0, %v305
    %307 = vdwg.mxu0
    %v308 = vsel %vm255, %v280, -inf
    %v309 = vsel %vm255, %v283, -inf
    %v310 = vmax.f32 %v308, %v309
    %v311 = vrot.slane %v310, 4
    %v312 = vmax.f32 %v310, %v311
    %v313 = vrot.slane %v312, 2
    %v314 = vmax.f32 %v312, %v313
    %v315 = vrot.slane %v314, 1
    %v316 = vmax.f32 %v314, %v315
    %v317 = vsel %vm255, %v303, -inf
    %v318 = vsel %vm255, %v306, -inf
    %v319 = vmax.f32 %v317, %v318
    %v320 = vrot.slane %v319, 4
    %v321 = vmax.f32 %v319, %v320
    %v322 = vrot.slane %v321, 2
    %v323 = vmax.f32 %v321, %v322
    %v324 = vrot.slane %v323, 1
    %v325 = vmax.f32 %v323, %v324
    %v326 = vsub.f32 %v280, %v316
    %v327 = vsub.f32 %v283, %v316
    %v328 = vsub.f32 %v303, %v325
    %v329 = vsub.f32 %v306, %v325
    %v330 = vmul.f32 %v326, 1.442695
    %v331 = vpow.pop %v330
    %v332 = vmul.f32 %v327, 1.442695
    %v333 = vpow.pop %v332
    %v334 = vmul.f32 %v328, 1.442695
    %v335 = vpow.pop %v334
    %v336 = vmul.f32 %v329, 1.442695
    %v337 = vpow.pop %v336
    %v338 = vsel %vm255, %v331, 0.0
    %v339 = vsel %vm255, %v333, 0.0
    %v340 = vadd.f32 %v338, %v339
    %v341 = vrot.slane %v340, 4
    %v342 = vadd.f32 %v340, %v341
    %v343 = vrot.slane %v342, 2
    %v344 = vadd.f32 %v342, %v343
    %v345 = vrot.slane %v344, 1
    %v346 = vadd.f32 %v344, %v345
    %v347 = vsel %vm255, %v335, 0.0
    %v348 = vsel %vm255, %v337, 0.0
    %v349 = vadd.f32 %v347, %v348
    %v350 = vrot.slane %v349, 4
    %v351 = vadd.f32 %v349, %v350
    %v352 = vrot.slane %v351, 2
    %v353 = vadd.f32 %v351, %v352
    %v354 = vrot.slane %v353, 1
    %v355 = vadd.f32 %v353, %v354
    %v356 = vrcp.pop %v346
    %v357 = vmul.f32 %v346, %v356
    %v358 = vsub.f32 1.0, %v357
    %v359 = vmul.f32 %v356, %v358
    %v360 = vadd.f32 %v356, %v359
    %vm361 = vweird.f32 %v346
    %vm362 = vweird.f32 %v356
    %vm363 = vmor %vm361, %vm362
    %v364 = vsel %vm363, %v356, %v360
    %v365 = vand.u32 2147483647, %v346
    %vm366 = vcmp.eq.f32.partialorder %v365, 8.507059e+37
    %v367 = vand.u32 %v346, 2147483648
    %v368 = vor.u32 1.1754944e-38, %v367
    %v369 = vsel %vm366, %v368, %v364
    %v370 = vmul.f32 %v331, %v369
    %v371 = vmul.f32 %v333, %v369
    %v372 = vrcp.pop %v355
    %v373 = vmul.f32 %v355, %v372
    %v374 = vsub.f32 1.0, %v373
    %v375 = vmul.f32 %v372, %v374
    %v376 = vadd.f32 %v372, %v375
    %vm377 = vweird.f32 %v355
    %vm378 = vweird.f32 %v372
    %vm379 = vmor %vm377, %vm378
    %v380 = vsel %vm379, %v372, %v376
    %v381 = vand.u32 2147483647, %v355
    %vm382 = vcmp.eq.f32.partialorder %v381, 8.507059e+37
    %v383 = vand.u32 %v355, 2147483648
    %v384 = vor.u32 1.1754944e-38, %v383
    %v385 = vsel %vm382, %v384, %v380
    %v386 = vmul.f32 %v335, %v385
    %v387 = vmul.f32 %v337, %v385
    %388 = vst.msk [vmem:[#allocation2] sm:$0xff] %vm255, %v370
    %389 = vst.msk [vmem:[#allocation2 + $0x8] sm:$0xff] %vm255, %v371
    %390 = vst.msk [vmem:[#allocation2 + $0x10] sm:$0xff] %vm255, %v386
    %391 = vst.msk [vmem:[#allocation2 + $0x18] sm:$0xff] %vm255, %v387
    // Predicated region
    $region22: #{tpu_custom_call.1} parent=1 // pred_check
      _
    $region23: #{tpu_custom_call.1} parent=1 // pred_check_branch
      %393 = sbr.rel (0) target = $region25
    $region24: #{tpu_custom_call.1} parent=1 // pred_region
      %395 = vsyncadd [#allocation3], 0
      %s396 = sshll.u32 [#allocation2], 4
      %s397 = int_to_ptr.vmem [resolvable:$true] %s396
      %s398 = sshll.u32 %s5, 4
      %s399 = int_to_ptr.hbm [resolvable:$true] %s398
      %404 = dma.vmem_to_hbm [thread:$0]  %s397, 512, %s399, [#allocation3], 128, 128, 8
    $region25: #{tpu_custom_call.1} parent=1 // pred_fallthru
      _
    // Predicated region
    $region26: #{tpu_custom_call.1} parent=1 // pred_check
      _
    $region27: #{tpu_custom_call.1} parent=1 // pred_check_branch
      %406 = sbr.rel (0) target = $region29
    $region28: #{tpu_custom_call.1} parent=1 // pred_region
      %408 = dma.done [#allocation3], 512
    $region29: #{tpu_custom_call.1} parent=1 // pred_fallthru
      _
    %409 = vsyncpa [#allocation3], 1

</llo_original>
